<compile_context>
chip_gen: v7x
topology: tpu7x:2x2x1
jax: 0.10.0
libtpu: 0.0.40
codegen_flags: <defaults>
</compile_context>

<pallas_src>
import jax
import jax.numpy as jnp
import numpy as np
from jax.experimental import pallas as pl
from jax.experimental.pallas import tpu as pltpu


_LANES = 512                     # lane-dense last dim (multiple of 128)
_MAX_BLOCK_ROWS = 4096           # 8 MiB f32 output block at 512 lanes
_MIN_BLOCK_ROWS = 512            # 1 MiB f32 output block: keeps 0.35 us/step overhead small
_TARGET_GRID_STEPS = 4           # >=2 so the "parallel" axis actually shards on v7x megacore
_PALLAS_MIN_ELEMS = 512 * 1024   # below this, pallas_call setup dominates -> plain XLA


def _vmem_pipeline_budget_bytes():
    """Budget for the double-buffered in+out pipeline, generation-aware."""
    cap = 64 * 1024 * 1024  # conservative default == v7x per-TensorCore VMEM
    try:
        info = pltpu.get_tpu_info()
        cap = int(getattr(info, "vmem_capacity_bytes", cap))
    except Exception:
        pass
    # 25% headroom for compiler scratch; never request more than 64 MiB scoped VMEM.
    return int(min((cap * 3) // 4, 64 * 1024 * 1024))


def _schedule_kernel(params_ref, t_ref, out_ref):
    # params_ref lives in SMEM: params_ref[0] = b, params_ref[1] = |w| (precomputed).
    # Input stays in its native dtype in HBM/VMEM; the widening cast happens in vregs.
    b = params_ref[0]
    w_abs = params_ref[1]
    x = t_ref[...].astype(jnp.float32)
    out_ref[...] = (b + w_abs * x).astype(out_ref.dtype)


def learned_linear_schedule_forward(t, b, w, *, force_pallas=False):
    """Pallas equivalent of LearnedLinearSchedule.forward: b + |w| * t."""
    t = jnp.asarray(t)
    # Params are f32; result is f32 (f64 is clamped -- Pallas TPU cannot lower it).
    out_dtype = jnp.float32
    # Keep native dtype only for TPU-friendly floats; everything else goes through f32.
    if t.dtype not in (jnp.float32, jnp.bfloat16, jnp.float16):
        t = t.astype(jnp.float32)

    orig_shape = t.shape
    n = t.size

    # Small inputs (the typical schedule call on a batch of timesteps): XLA fallback.
    if n == 0 or (n < _PALLAS_MIN_ELEMS and not force_pallas):
        bb = jnp.asarray(b, out_dtype)
        ww = jnp.abs(jnp.asarray(w, out_dtype))
        return (bb + ww * t.astype(out_dtype)).astype(out_dtype)

    flat = t.reshape(-1)

    # Prefer a lane width that divides n exactly (zero padding, zero output slice);
    # otherwise pad the tail by < 512 elements only. No rows->8 padding: Pallas masks
    # the trailing partial row block.
    cols = None
    for cand in (_LANES, 256, 128):
        if n % cand == 0:
            cols = cand
            break
    padded = False
    if cols is None:
        cols = _LANES
        pad = (-n) % cols
        flat = jnp.pad(flat, (0, pad))
        padded = True
    rows = flat.size // cols
    t2d = flat.reshape(rows, cols)

    in_item = np.dtype(t.dtype).itemsize
    out_item = np.dtype(out_dtype).itemsize

    budget = _vmem_pipeline_budget_bytes()
    bytes_per_row_pipeline = 2 * cols * (in_item + out_item)  # double-buffered in + out
    max_rows_by_vmem = max(8, ((budget // bytes_per_row_pipeline) // 8) * 8)

    # Aim for ~_TARGET_GRID_STEPS steps, but keep blocks big enough to amortize the
    # ~0.35 us per-step overhead and small enough to fit the VMEM budget.
    block_rows = pl.cdiv(rows, _TARGET_GRID_STEPS)
    block_rows = ((block_rows + 7) // 8) * 8
    block_rows = max(block_rows, _MIN_BLOCK_ROWS)
    block_rows = min(block_rows, _MAX_BLOCK_ROWS, max_rows_by_vmem)
    if block_rows >= rows:
        block_rows = rows  # single full block (full array dim is always a legal block dim)
    grid = (pl.cdiv(rows, block_rows),)

    params = jnp.stack([
        jnp.asarray(b, jnp.float32).reshape(()),
        jnp.abs(jnp.asarray(w, jnp.float32)).reshape(()),
    ])

    out2d = pl.pallas_call(
        _schedule_kernel,
        out_shape=jax.ShapeDtypeStruct((rows, cols), out_dtype),
        grid=grid,
        in_specs=[
            pl.BlockSpec(memory_space=pltpu.MemorySpace.SMEM),   # (b, |w|) scalars
            pl.BlockSpec((block_rows, cols), lambda i: (i, 0)),  # t tile (VMEM, native dtype)
        ],
        out_specs=pl.BlockSpec((block_rows, cols), lambda i: (i, 0)),
        compiler_params=pltpu.CompilerParams(
            # v7x: shard the row grid across both TensorCores; no-op on v5e/v6e.
            dimension_semantics=("parallel",),
            vmem_limit_bytes=budget,
        ),
        cost_estimate=pl.CostEstimate(
            flops=2 * n,
            transcendentals=0,
            bytes_accessed=n * (in_item + out_item),
        ),
    )(params, t2d)

    if padded:
        return out2d.reshape(-1)[:n].reshape(orig_shape)
    return out2d.reshape(orig_shape)


if __name__ == "__main__":
    # Deterministic parameter init mirroring __init__(min=0.1, max=15):
    #   b = 0.1, w = 15 - 0.1 = 14.9
    b_param = 0.1
    w_param = 15.0 - 0.1

    key = jax.random.PRNGKey(0)
    k1, k2, k3, k4 = jax.random.split(key, 4)

    def ref_fn(t):
        return b_param + abs(w_param) * t

    # 1) Lane-aligned f32 batch, large enough for the Pallas path: rows=2048,
    #    block_rows=512 -> grid=(4,), exercising the multi-step "parallel" grid.
    t_big = jax.random.uniform(k1, (2048, 512), dtype=jnp.float32)
    out_big = jax.block_until_ready(
        learned_linear_schedule_forward(t_big, b_param, w_param))
    assert out_big.shape == t_big.shape and out_big.dtype == jnp.float32
    assert jnp.max(jnp.abs(out_big - ref_fn(t_big))) < 1e-4

    # 2) Ragged, non-lane-aligned shape forced through Pallas: <512-element tail pad
    #    plus masked partial block.
    t_ragged = jax.random.uniform(k2, (7, 100), dtype=jnp.float32)
    out_ragged = jax.block_until_ready(
        learned_linear_schedule_forward(t_ragged, b_param, w_param, force_pallas=True))
    assert out_ragged.shape == t_ragged.shape
    assert jnp.max(jnp.abs(out_ragged - ref_fn(t_ragged))) < 1e-4

    # 3) bf16 input forced through Pallas: the widening cast happens inside the kernel
    #    (2-byte HBM reads), output promoted to f32 as in torch.
    t_bf16 = jax.random.uniform(k3, (256, 384), dtype=jnp.float32).astype(jnp.bfloat16)
    out_bf16 = jax.block_until_ready(
        learned_linear_schedule_forward(t_bf16, b_param, w_param, force_pallas=True))
    assert out_bf16.shape == t_bf16.shape and out_bf16.dtype == jnp.float32
    ref_bf16 = ref_fn(t_bf16.astype(jnp.float32))
    assert jnp.max(jnp.abs(out_bf16 - ref_bf16)) < 1e-4

    # 4) Tiny 1-D t (the typical schedule call) takes the plain-XLA fallback.
    t_small = jax.random.uniform(k4, (8,), dtype=jnp.float32)
    out_small = jax.block_until_ready(
        learned_linear_schedule_forward(t_small, b_param, w_param))
    assert out_small.shape == t_small.shape
    assert jnp.max(jnp.abs(out_small - ref_fn(t_small))) < 1e-4

    print("KERNEL_OK")
</pallas_src>

<mosaic_0001>
module attributes {stable_mosaic.version = 11 : i64} {
  func.func @_schedule_kernel(%arg0: i32, %arg1: memref<2xf32, #tpu.memory_space<smem>>, %arg2: memref<512x512xf32, #tpu.memory_space<vmem>>, %arg3: memref<512x512xf32, #tpu.memory_space<vmem>>) attributes {dimension_semantics = [#tpu.dimension_semantics<parallel>], iteration_bounds = array<i64: 4>, scalar_prefetch = 0 : i64, scratch_operands = 0 : i64, tpu.core_type = #tpu.core_type<tc>, window_params = [{transform_indices = @transform_0, window_bounds = array<i64: 2>}, {transform_indices = @transform_1, window_bounds = array<i64: 512, 512>}, {transform_indices = @transform_2, window_bounds = array<i64: 512, 512>}]} {
    %c0 = arith.constant 0 : index
    %0 = memref.load %arg1[%c0] : memref<2xf32, #tpu.memory_space<smem>>
    %c1 = arith.constant 1 : index
    %1 = memref.load %arg1[%c1] : memref<2xf32, #tpu.memory_space<smem>>
    %c0_0 = arith.constant 0 : index
    %c0_1 = arith.constant 0 : index
    %2 = vector.load %arg2[%c0_0, %c0_1] : memref<512x512xf32, #tpu.memory_space<vmem>>, vector<512x512xf32>
    %3 = vector.broadcast %1 : f32 to vector<512x512xf32>
    %4 = arith.mulf %3, %2 : vector<512x512xf32>
    %5 = vector.broadcast %0 : f32 to vector<512x512xf32>
    %6 = arith.addf %5, %4 : vector<512x512xf32>
    %c0_2 = arith.constant 0 : index
    %c0_3 = arith.constant 0 : index
    %7 = vector.load %arg3[%c0_2, %c0_3] : memref<512x512xf32, #tpu.memory_space<vmem>>, vector<512x512xf32>
    tpu.vector_store %arg3[%c0_2, %c0_3], %6 {strides = array<i32>} : memref<512x512xf32, #tpu.memory_space<vmem>>, vector<512x512xf32>,
    return
  }
  func.func @transform_0(%arg0: i32) -> i32 {
    %c0_i32 = arith.constant 0 : i32
    %c0_i32_0 = arith.constant 0 : i32
    return %c0_i32 : i32
  }
  func.func @transform_1(%arg0: i32) -> (i32, i32) {
    %c0_i32 = arith.constant 0 : i32
    %c0_i32_0 = arith.constant 0 : i32
    return %arg0, %c0_i32 : i32, i32
  }
  func.func @transform_2(%arg0: i32) -> (i32, i32) {
    %c0_i32 = arith.constant 0 : i32
    %c0_i32_0 = arith.constant 0 : i32
    return %arg0, %c0_i32 : i32, i32
  }
}

</mosaic_0001>

<llo_original>
// kernel: tpu_custom_call.1
$region0: #{tpu_custom_call.1}
  #allocation0 [shape = 'u32[]', space=smem, size = 0x4, offset = 0x4, fixed_abs, tag = 'smem constant byte address 0x4 - core index']
  #allocation1 [shape = 'u32[144,128]{1,0:T(1,128)}', space=vmem, size = 0x12000, scoped, tag = 'internal scratch']
  %s0 = inlined_call_operand.hbm [shape: f32[2], index: 0, kind: input, shape index: {}]
  %s1 = inlined_call_operand.hbm [shape: f32[2048,512], index: 1, kind: input, shape index: {}]
  %s2 = inlined_call_operand.hbm [shape: f32[2048,512], index: 2, kind: output, shape index: {}]
  %s3 = sld [smem:[#allocation0]]
  $region49: #{tpu_custom_call.1} parent=0
    _
  %s5 = ssub.s32 1, %s3
  %s6 = scalar_select 0, %s5, %s3
  $region1: #{tpu_custom_call.1} parent=0
    #allocation2 [shape = 'u8[512]{0}', space=smem, size = 0x200, scoped, tag = 'input window, operand 0, single buffered']
    #allocation3 [shape = 's32[2]{0}', space=sflag, size = 0x8, scoped, tag = 'scoped memory for tpu_custom_call.1']
    #allocation4 [shape = 's32[2]{0}', space=sflag, size = 0x8, scoped, tag = 'scoped memory for tpu_custom_call.1']
    #allocation5 [shape = 's32[2]{0}', space=sflag, size = 0x8, scoped, tag = 'scoped memory for tpu_custom_call.1']
    #allocation6 [shape = 'u8[2097152]{0}', space=vmem, size = 0x200000, scoped, tag = 'input window, operand 1']
    #allocation7 [shape = 'u8[2097152]{0}', space=vmem, size = 0x200000, scoped, tag = 'output window, operand 0']
    %7 = vsyncpa [#allocation5], 0
    %8 = vsyncpa [#allocation3], 0
    %s9 = scalar_lea.sflag [#allocation3], 1
    %10 = vsyncpa %s9, 0
    %11 = vsyncpa [#allocation4], 0
    %s12 = scalar_lea.sflag [#allocation4], 1
    %13 = vsyncpa %s12, 0
    loop: start=0, step=1, limit=6
    $region2: #{tpu_custom_call.1} parent=1 // loop_pre_header
      _
    $region3: #{tpu_custom_call.1} parent=1 // loop_header
      %s15 = sphi 0, %s19
      %p16 = scmp.ge.s32.totalorder %s15, 6
      %s23 = sphi 0, %s23
      %s25 = sphi 0, %s23
      %s26 = sphi 0, %s25
      %s40 = sphi 0, %s26
      %s46 = sphi 0, %s48
      %s49 = sphi 0, %s46
      %s50 = sphi 0, %s49
      %s66 = sphi 0, %s50
      %s72 = sphi 0, %s74
      %s75 = sphi 0, %s72
      %s76 = sphi 0, %s75
      %s92 = sphi 0, %s76
    $region4: #{tpu_custom_call.1} parent=1 // loop_header_branch
      %18 = sbr.rel (%p16) target = $region8
    $region5: #{tpu_custom_call.1} parent=1 // loop_body
      %s20 = ssub.s32 %s15, 1
      %s21 = ssub.s32 %s15, 2
      %s22 = sadd.s32 %s15, 1
      %s24 = sadd.s32 %s23, 1
      %p27 = scmp.eq.s32.totalorder %s15, 3
      %p28 = scmp.ne.s32.totalorder %s23, %s25
      %p29 = scmp.eq.s32.totalorder %s15, 0
      %p30 = por %p28, %p29
      %p31 = scmp.ne.s32.totalorder %s23, %s25
      %p32 = scmp.eq.s32.totalorder %s20, 3
      %p33 = por %p31, %p32
      %p34 = scmp.ne.s32.totalorder %s25, %s26
      %p35 = scmp.eq.s32.totalorder %s20, 0
      %p36 = por %p34, %p35
      %p37 = scmp.ne.s32.totalorder %s25, %s26
      %p38 = scmp.eq.s32.totalorder %s21, 3
      %p39 = por %p37, %p38
      %p41 = scmp.ne.s32.totalorder %s26, %s40
      %p42 = scmp.eq.s32.totalorder %s21, 0
      %p43 = por %p41, %p42
      %s44 = ssub.s32 %s15, %s22
      %p45 = scmp.eq.s32.totalorder %s44, 0
      %s47 = sadd.s32 %s46, 1
      %s48 = scalar_select %p45, %s46, %s47
      %p51 = pneg %p45
      %p52 = scmp.eq.s32.totalorder %s15, 3
      %p53 = por %p51, %p52
      %p54 = scmp.ne.s32.totalorder %s46, %s49
      %p55 = scmp.eq.s32.totalorder %s15, 0
      %p56 = por %p54, %p55
      %p57 = scmp.ne.s32.totalorder %s46, %s49
      %p58 = scmp.eq.s32.totalorder %s20, 3
      %p59 = por %p57, %p58
      %p60 = scmp.ne.s32.totalorder %s49, %s50
      %p61 = scmp.eq.s32.totalorder %s20, 0
      %p62 = por %p60, %p61
      %p63 = scmp.ne.s32.totalorder %s49, %s50
      %p64 = scmp.eq.s32.totalorder %s21, 3
      %p65 = por %p63, %p64
      %p67 = scmp.ne.s32.totalorder %s50, %s66
      %p68 = scmp.eq.s32.totalorder %s21, 0
      %p69 = por %p67, %p68
      %s70 = ssub.s32 %s15, %s22
      %p71 = scmp.eq.s32.totalorder %s70, 0
      %s73 = sadd.s32 %s72, 1
      %s74 = scalar_select %p71, %s72, %s73
      %p77 = pneg %p71
      %p78 = scmp.eq.s32.totalorder %s15, 3
      %p79 = por %p77, %p78
      %p80 = scmp.ne.s32.totalorder %s72, %s75
      %p81 = scmp.eq.s32.totalorder %s15, 0
      %p82 = por %p80, %p81
      %p83 = scmp.ne.s32.totalorder %s72, %s75
      %p84 = scmp.eq.s32.totalorder %s20, 3
      %p85 = por %p83, %p84
      %p86 = scmp.ne.s32.totalorder %s75, %s76
      %p87 = scmp.eq.s32.totalorder %s20, 0
      %p88 = por %p86, %p87
      %p89 = scmp.ne.s32.totalorder %s75, %s76
      %p90 = scmp.eq.s32.totalorder %s21, 3
      %p91 = por %p89, %p90
      %p93 = scmp.ne.s32.totalorder %s76, %s92
      %p94 = scmp.eq.s32.totalorder %s21, 0
      %p95 = por %p93, %p94
      %p96 = scmp.le.s32.totalorder 1, %s15
      %p97 = scmp.lt.s32.totalorder %s15, 5
      %p98 = pnand %p96, %p97
      %p99 = pneg %p98
      // Predicated region
      $region9: #{tpu_custom_call.1} parent=5 // pred_check
        _
      $region10: #{tpu_custom_call.1} parent=5 // pred_check_branch
        %101 = sbr.rel (%p98) target = $region12
      $region11: #{tpu_custom_call.1} parent=5 // pred_region
        %s102 = ssub.s32 %s15, 1
        // Predicated region
        $region13: #{tpu_custom_call.1} parent=11 // pred_check
          %p103 = pneg %p36
        $region14: #{tpu_custom_call.1} parent=11 // pred_check_branch
          %105 = sbr.rel (%p103) target = $region16
        $region15: #{tpu_custom_call.1} parent=11 // pred_region
          %s107 = ssub.s32 16, 16
          %108 = vsyncadd [#allocation5], %s107
          %111 = dma.hbm_to_smem %s0, 16, [#allocation2], [#allocation5]
        $region16: #{tpu_custom_call.1} parent=11 // pred_fallthru
          _
      $region12: #{tpu_custom_call.1} parent=5 // pred_fallthru
        _
      %p112 = scmp.lt.s32.totalorder %s15, 4
      // Predicated region
      $region17: #{tpu_custom_call.1} parent=5 // pred_check
        %p113 = pneg %p112
      $region18: #{tpu_custom_call.1} parent=5 // pred_check_branch
        %115 = sbr.rel (%p113) target = $region20
      $region19: #{tpu_custom_call.1} parent=5 // pred_region
        // Predicated region
        $region21: #{tpu_custom_call.1} parent=19 // pred_check
          %p116 = pneg %p56
        $region22: #{tpu_custom_call.1} parent=19 // pred_check_branch
          %118 = sbr.rel (%p116) target = $region24
        $region23: #{tpu_custom_call.1} parent=19 // pred_region
          %s119 = sand.u32 %s46, 1
          %s120 = scalar_lea.sflag [#allocation3], %s119
          %s121 = sand.u32 %s46, 1
          %s122 = smul.addr %s121, 2048
          %s123 = scalar_lea.vmem [#allocation6], %s122
          %s124 = smul.u32 64, %s15
          %s126 = ssub.s32 32768, 32768
          %127 = vsyncadd %s120, %s126
          %s128 = smul.addr %s124, 4
          %s129 = smul.addr %s128, 128
          %s130 = scalar_lea.hbm %s1, %s129
          %s131 = sshll.u32 %s123, 4
          %s132 = int_to_ptr.vmem [resolvable:$true] %s131
          %137 = dma.hbm_to_vmem [thread:$0]  %s130, 32768, %s132, %s120, 512, 512, 32
        $region24: #{tpu_custom_call.1} parent=19 // pred_fallthru
          _
      $region20: #{tpu_custom_call.1} parent=5 // pred_fallthru
        _
      %p138 = scmp.le.s32.totalorder 1, %s15
      %p139 = scmp.lt.s32.totalorder %s15, 5
      %p140 = pnand %p138, %p139
      %p141 = pneg %p140
      // Predicated region
      $region25: #{tpu_custom_call.1} parent=5 // pred_check
        _
      $region26: #{tpu_custom_call.1} parent=5 // pred_check_branch
        %143 = sbr.rel (%p140) target = $region28
      $region27: #{tpu_custom_call.1} parent=5 // pred_region
        %s144 = ssub.s32 %s15, 1
        // Predicated region
        $region29: #{tpu_custom_call.1} parent=27 // pred_check
          %p145 = pneg %p36
        $region30: #{tpu_custom_call.1} parent=27 // pred_check_branch
          %147 = sbr.rel (%p145) target = $region32
        $region31: #{tpu_custom_call.1} parent=27 // pred_region
          %148 = dma.done [#allocation5], 16
        $region32: #{tpu_custom_call.1} parent=27 // pred_fallthru
          _
        %s149 = sand.u32 %s49, 1
        %s150 = scalar_lea.sflag [#allocation3], %s149
        %s151 = sand.u32 %s49, 1
        %s152 = smul.addr %s151, 2048
        %s153 = scalar_lea.vmem [#allocation6], %s152
        // Predicated region
        $region33: #{tpu_custom_call.1} parent=27 // pred_check
          %p154 = pneg %p62
        $region34: #{tpu_custom_call.1} parent=27 // pred_check_branch
          %156 = sbr.rel (%p154) target = $region36
        $region35: #{tpu_custom_call.1} parent=27 // pred_region
          %157 = dma.done %s150, 32768
        $region36: #{tpu_custom_call.1} parent=27 // pred_fallthru
          _
        %158 = sfence
        %p159 = pneg %p36
        %p160 = pneg %p33
        %s161 = sand.u32 %s49, 1
        %s162 = scalar_lea.sflag [#allocation3], %s161
        %s163 = sand.u32 %s49, 1
        %s164 = smul.addr %s163, 2048
        %s165 = scalar_lea.vmem [#allocation6], %s164
        %p166 = pneg %p62
        %p167 = pneg %p59
        %p168 = pneg %p88
        %p169 = pneg %p85
        %s170 = sand.u32 %s75, 1
        %s171 = scalar_lea.sflag [#allocation4], %s170
        %s172 = sand.u32 %s75, 1
        %s173 = smul.addr %s172, 2048
        %s174 = scalar_lea.vmem [#allocation7], %s173
        %s175 = smul.u32 64, %s20
        %s176 = smul.u32 64, %s20
        %s177 = sld [smem:[#allocation2]]
        %s178 = sld [smem:[#allocation2 + $0x1]]
        %v179 = vld [vmem:[%s153] sm:$0xff]
        %v180 = vld [vmem:[%s153 + $0x8] sm:$0xff]
        %v181 = vld [vmem:[%s153 + $0x10] sm:$0xff]
        %v182 = vld [vmem:[%s153 + $0x18] sm:$0xff]
        %v183 = vld [vmem:[%s153 + $0x20] sm:$0xff]
        %v184 = vld [vmem:[%s153 + $0x28] sm:$0xff]
        %v185 = vld [vmem:[%s153 + $0x30] sm:$0xff]
        %v186 = vld [vmem:[%s153 + $0x38] sm:$0xff]
        %v187 = vld [vmem:[%s153 + $0x40] sm:$0xff]
        %v188 = vld [vmem:[%s153 + $0x48] sm:$0xff]
        %v189 = vld [vmem:[%s153 + $0x50] sm:$0xff]
        %v190 = vld [vmem:[%s153 + $0x58] sm:$0xff]
        %v191 = vld [vmem:[%s153 + $0x60] sm:$0xff]
        %v192 = vld [vmem:[%s153 + $0x68] sm:$0xff]
        %v193 = vld [vmem:[%s153 + $0x70] sm:$0xff]
        %v194 = vld [vmem:[%s153 + $0x78] sm:$0xff]
        %v195 = vld [vmem:[%s153 + $0x80] sm:$0xff]
        %v196 = vld [vmem:[%s153 + $0x88] sm:$0xff]
        %v197 = vld [vmem:[%s153 + $0x90] sm:$0xff]
        %v198 = vld [vmem:[%s153 + $0x98] sm:$0xff]
        %v199 = vld [vmem:[%s153 + $0xa0] sm:$0xff]
        %v200 = vld [vmem:[%s153 + $0xa8] sm:$0xff]
        %v201 = vld [vmem:[%s153 + $0xb0] sm:$0xff]
        %v202 = vld [vmem:[%s153 + $0xb8] sm:$0xff]
        %v203 = vld [vmem:[%s153 + $0xc0] sm:$0xff]
        %v204 = vld [vmem:[%s153 + $0xc8] sm:$0xff]
        %v205 = vld [vmem:[%s153 + $0xd0] sm:$0xff]
        %v206 = vld [vmem:[%s153 + $0xd8] sm:$0xff]
        %v207 = vld [vmem:[%s153 + $0xe0] sm:$0xff]
        %v208 = vld [vmem:[%s153 + $0xe8] sm:$0xff]
        %v209 = vld [vmem:[%s153 + $0xf0] sm:$0xff]
        %v210 = vld [vmem:[%s153 + $0xf8] sm:$0xff]
        %v211 = vld [vmem:[%s153 + $0x100] sm:$0xff]
        %v212 = vld [vmem:[%s153 + $0x108] sm:$0xff]
        %v213 = vld [vmem:[%s153 + $0x110] sm:$0xff]
        %v214 = vld [vmem:[%s153 + $0x118] sm:$0xff]
        %v215 = vld [vmem:[%s153 + $0x120] sm:$0xff]
        %v216 = vld [vmem:[%s153 + $0x128] sm:$0xff]
        %v217 = vld [vmem:[%s153 + $0x130] sm:$0xff]
        %v218 = vld [vmem:[%s153 + $0x138] sm:$0xff]
        %v219 = vld [vmem:[%s153 + $0x140] sm:$0xff]
        %v220 = vld [vmem:[%s153 + $0x148] sm:$0xff]
        %v221 = vld [vmem:[%s153 + $0x150] sm:$0xff]
        %v222 = vld [vmem:[%s153 + $0x158] sm:$0xff]
        %v223 = vld [vmem:[%s153 + $0x160] sm:$0xff]
        %v224 = vld [vmem:[%s153 + $0x168] sm:$0xff]
        %v225 = vld [vmem:[%s153 + $0x170] sm:$0xff]
        %v226 = vld [vmem:[%s153 + $0x178] sm:$0xff]
        %v227 = vld [vmem:[%s153 + $0x180] sm:$0xff]
        %v228 = vld [vmem:[%s153 + $0x188] sm:$0xff]
        %v229 = vld [vmem:[%s153 + $0x190] sm:$0xff]
        %v230 = vld [vmem:[%s153 + $0x198] sm:$0xff]
        %v231 = vld [vmem:[%s153 + $0x1a0] sm:$0xff]
        %v232 = vld [vmem:[%s153 + $0x1a8] sm:$0xff]
        %v233 = vld [vmem:[%s153 + $0x1b0] sm:$0xff]
        %v234 = vld [vmem:[%s153 + $0x1b8] sm:$0xff]
        %v235 = vld [vmem:[%s153 + $0x1c0] sm:$0xff]
        %v236 = vld [vmem:[%s153 + $0x1c8] sm:$0xff]
        %v237 = vld [vmem:[%s153 + $0x1d0] sm:$0xff]
        %v238 = vld [vmem:[%s153 + $0x1d8] sm:$0xff]
        %v239 = vld [vmem:[%s153 + $0x1e0] sm:$0xff]
        %v240 = vld [vmem:[%s153 + $0x1e8] sm:$0xff]
        %v241 = vld [vmem:[%s153 + $0x1f0] sm:$0xff]
        %v242 = vld [vmem:[%s153 + $0x1f8] sm:$0xff]
        %v243 = vld [vmem:[%s153 + $0x200] sm:$0xff]
        %v244 = vld [vmem:[%s153 + $0x208] sm:$0xff]
        %v245 = vld [vmem:[%s153 + $0x210] sm:$0xff]
        %v246 = vld [vmem:[%s153 + $0x218] sm:$0xff]
        %v247 = vld [vmem:[%s153 + $0x220] sm:$0xff]
        %v248 = vld [vmem:[%s153 + $0x228] sm:$0xff]
        %v249 = vld [vmem:[%s153 + $0x230] sm:$0xff]
        %v250 = vld [vmem:[%s153 + $0x238] sm:$0xff]
        %v251 = vld [vmem:[%s153 + $0x240] sm:$0xff]
        %v252 = vld [vmem:[%s153 + $0x248] sm:$0xff]
        %v253 = vld [vmem:[%s153 + $0x250] sm:$0xff]
        %v254 = vld [vmem:[%s153 + $0x258] sm:$0xff]
        %v255 = vld [vmem:[%s153 + $0x260] sm:$0xff]
        %v256 = vld [vmem:[%s153 + $0x268] sm:$0xff]
        %v257 = vld [vmem:[%s153 + $0x270] sm:$0xff]
        %v258 = vld [vmem:[%s153 + $0x278] sm:$0xff]
        %v259 = vld [vmem:[%s153 + $0x280] sm:$0xff]
        %v260 = vld [vmem:[%s153 + $0x288] sm:$0xff]
        %v261 = vld [vmem:[%s153 + $0x290] sm:$0xff]
        %v262 = vld [vmem:[%s153 + $0x298] sm:$0xff]
        %v263 = vld [vmem:[%s153 + $0x2a0] sm:$0xff]
        %v264 = vld [vmem:[%s153 + $0x2a8] sm:$0xff]
        %v265 = vld [vmem:[%s153 + $0x2b0] sm:$0xff]
        %v266 = vld [vmem:[%s153 + $0x2b8] sm:$0xff]
        %v267 = vld [vmem:[%s153 + $0x2c0] sm:$0xff]
        %v268 = vld [vmem:[%s153 + $0x2c8] sm:$0xff]
        %v269 = vld [vmem:[%s153 + $0x2d0] sm:$0xff]
        %v270 = vld [vmem:[%s153 + $0x2d8] sm:$0xff]
        %v271 = vld [vmem:[%s153 + $0x2e0] sm:$0xff]
        %v272 = vld [vmem:[%s153 + $0x2e8] sm:$0xff]
        %v273 = vld [vmem:[%s153 + $0x2f0] sm:$0xff]
        %v274 = vld [vmem:[%s153 + $0x2f8] sm:$0xff]
        %v275 = vld [vmem:[%s153 + $0x300] sm:$0xff]
        %v276 = vld [vmem:[%s153 + $0x308] sm:$0xff]
        %v277 = vld [vmem:[%s153 + $0x310] sm:$0xff]
        %v278 = vld [vmem:[%s153 + $0x318] sm:$0xff]
        %v279 = vld [vmem:[%s153 + $0x320] sm:$0xff]
        %v280 = vld [vmem:[%s153 + $0x328] sm:$0xff]
        %v281 = vld [vmem:[%s153 + $0x330] sm:$0xff]
        %v282 = vld [vmem:[%s153 + $0x338] sm:$0xff]
        %v283 = vld [vmem:[%s153 + $0x340] sm:$0xff]
        %v284 = vld [vmem:[%s153 + $0x348] sm:$0xff]
        %v285 = vld [vmem:[%s153 + $0x350] sm:$0xff]
        %v286 = vld [vmem:[%s153 + $0x358] sm:$0xff]
        %v287 = vld [vmem:[%s153 + $0x360] sm:$0xff]
        %v288 = vld [vmem:[%s153 + $0x368] sm:$0xff]
        %v289 = vld [vmem:[%s153 + $0x370] sm:$0xff]
        %v290 = vld [vmem:[%s153 + $0x378] sm:$0xff]
        %v291 = vld [vmem:[%s153 + $0x380] sm:$0xff]
        %v292 = vld [vmem:[%s153 + $0x388] sm:$0xff]
        %v293 = vld [vmem:[%s153 + $0x390] sm:$0xff]
        %v294 = vld [vmem:[%s153 + $0x398] sm:$0xff]
        %v295 = vld [vmem:[%s153 + $0x3a0] sm:$0xff]
        %v296 = vld [vmem:[%s153 + $0x3a8] sm:$0xff]
        %v297 = vld [vmem:[%s153 + $0x3b0] sm:$0xff]
        %v298 = vld [vmem:[%s153 + $0x3b8] sm:$0xff]
        %v299 = vld [vmem:[%s153 + $0x3c0] sm:$0xff]
        %v300 = vld [vmem:[%s153 + $0x3c8] sm:$0xff]
        %v301 = vld [vmem:[%s153 + $0x3d0] sm:$0xff]
        %v302 = vld [vmem:[%s153 + $0x3d8] sm:$0xff]
        %v303 = vld [vmem:[%s153 + $0x3e0] sm:$0xff]
        %v304 = vld [vmem:[%s153 + $0x3e8] sm:$0xff]
        %v305 = vld [vmem:[%s153 + $0x3f0] sm:$0xff]
        %v306 = vld [vmem:[%s153 + $0x3f8] sm:$0xff]
        %v307 = vld [vmem:[%s153 + $0x400] sm:$0xff]
        %v308 = vld [vmem:[%s153 + $0x408] sm:$0xff]
        %v309 = vld [vmem:[%s153 + $0x410] sm:$0xff]
        %v310 = vld [vmem:[%s153 + $0x418] sm:$0xff]
        %v311 = vld [vmem:[%s153 + $0x420] sm:$0xff]
        %v312 = vld [vmem:[%s153 + $0x428] sm:$0xff]
        %v313 = vld [vmem:[%s153 + $0x430] sm:$0xff]
        %v314 = vld [vmem:[%s153 + $0x438] sm:$0xff]
        %v315 = vld [vmem:[%s153 + $0x440] sm:$0xff]
        %v316 = vld [vmem:[%s153 + $0x448] sm:$0xff]
        %v317 = vld [vmem:[%s153 + $0x450] sm:$0xff]
        %v318 = vld [vmem:[%s153 + $0x458] sm:$0xff]
        %v319 = vld [vmem:[%s153 + $0x460] sm:$0xff]
        %v320 = vld [vmem:[%s153 + $0x468] sm:$0xff]
        %v321 = vld [vmem:[%s153 + $0x470] sm:$0xff]
        %v322 = vld [vmem:[%s153 + $0x478] sm:$0xff]
        %v323 = vld [vmem:[%s153 + $0x480] sm:$0xff]
        %v324 = vld [vmem:[%s153 + $0x488] sm:$0xff]
        %v325 = vld [vmem:[%s153 + $0x490] sm:$0xff]
        %v326 = vld [vmem:[%s153 + $0x498] sm:$0xff]
        %v327 = vld [vmem:[%s153 + $0x4a0] sm:$0xff]
        %v328 = vld [vmem:[%s153 + $0x4a8] sm:$0xff]
        %v329 = vld [vmem:[%s153 + $0x4b0] sm:$0xff]
        %v330 = vld [vmem:[%s153 + $0x4b8] sm:$0xff]
        %v331 = vld [vmem:[%s153 + $0x4c0] sm:$0xff]
        %v332 = vld [vmem:[%s153 + $0x4c8] sm:$0xff]
        %v333 = vld [vmem:[%s153 + $0x4d0] sm:$0xff]
        %v334 = vld [vmem:[%s153 + $0x4d8] sm:$0xff]
        %v335 = vld [vmem:[%s153 + $0x4e0] sm:$0xff]
        %v336 = vld [vmem:[%s153 + $0x4e8] sm:$0xff]
        %v337 = vld [vmem:[%s153 + $0x4f0] sm:$0xff]
        %v338 = vld [vmem:[%s153 + $0x4f8] sm:$0xff]
        %v339 = vld [vmem:[%s153 + $0x500] sm:$0xff]
        %v340 = vld [vmem:[%s153 + $0x508] sm:$0xff]
        %v341 = vld [vmem:[%s153 + $0x510] sm:$0xff]
        %v342 = vld [vmem:[%s153 + $0x518] sm:$0xff]
        %v343 = vld [vmem:[%s153 + $0x520] sm:$0xff]
        %v344 = vld [vmem:[%s153 + $0x528] sm:$0xff]
        %v345 = vld [vmem:[%s153 + $0x530] sm:$0xff]
        %v346 = vld [vmem:[%s153 + $0x538] sm:$0xff]
        %v347 = vld [vmem:[%s153 + $0x540] sm:$0xff]
        %v348 = vld [vmem:[%s153 + $0x548] sm:$0xff]
        %v349 = vld [vmem:[%s153 + $0x550] sm:$0xff]
        %v350 = vld [vmem:[%s153 + $0x558] sm:$0xff]
        %v351 = vld [vmem:[%s153 + $0x560] sm:$0xff]
        %v352 = vld [vmem:[%s153 + $0x568] sm:$0xff]
        %v353 = vld [vmem:[%s153 + $0x570] sm:$0xff]
        %v354 = vld [vmem:[%s153 + $0x578] sm:$0xff]
        %v355 = vld [vmem:[%s153 + $0x580] sm:$0xff]
        %v356 = vld [vmem:[%s153 + $0x588] sm:$0xff]
        %v357 = vld [vmem:[%s153 + $0x590] sm:$0xff]
        %v358 = vld [vmem:[%s153 + $0x598] sm:$0xff]
        %v359 = vld [vmem:[%s153 + $0x5a0] sm:$0xff]
        %v360 = vld [vmem:[%s153 + $0x5a8] sm:$0xff]
        %v361 = vld [vmem:[%s153 + $0x5b0] sm:$0xff]
        %v362 = vld [vmem:[%s153 + $0x5b8] sm:$0xff]
        %v363 = vld [vmem:[%s153 + $0x5c0] sm:$0xff]
        %v364 = vld [vmem:[%s153 + $0x5c8] sm:$0xff]
        %v365 = vld [vmem:[%s153 + $0x5d0] sm:$0xff]
        %v366 = vld [vmem:[%s153 + $0x5d8] sm:$0xff]
        %v367 = vld [vmem:[%s153 + $0x5e0] sm:$0xff]
        %v368 = vld [vmem:[%s153 + $0x5e8] sm:$0xff]
        %v369 = vld [vmem:[%s153 + $0x5f0] sm:$0xff]
        %v370 = vld [vmem:[%s153 + $0x5f8] sm:$0xff]
        %v371 = vld [vmem:[%s153 + $0x600] sm:$0xff]
        %v372 = vld [vmem:[%s153 + $0x608] sm:$0xff]
        %v373 = vld [vmem:[%s153 + $0x610] sm:$0xff]
        %v374 = vld [vmem:[%s153 + $0x618] sm:$0xff]
        %v375 = vld [vmem:[%s153 + $0x620] sm:$0xff]
        %v376 = vld [vmem:[%s153 + $0x628] sm:$0xff]
        %v377 = vld [vmem:[%s153 + $0x630] sm:$0xff]
        %v378 = vld [vmem:[%s153 + $0x638] sm:$0xff]
        %v379 = vld [vmem:[%s153 + $0x640] sm:$0xff]
        %v380 = vld [vmem:[%s153 + $0x648] sm:$0xff]
        %v381 = vld [vmem:[%s153 + $0x650] sm:$0xff]
        %v382 = vld [vmem:[%s153 + $0x658] sm:$0xff]
        %v383 = vld [vmem:[%s153 + $0x660] sm:$0xff]
        %v384 = vld [vmem:[%s153 + $0x668] sm:$0xff]
        %v385 = vld [vmem:[%s153 + $0x670] sm:$0xff]
        %v386 = vld [vmem:[%s153 + $0x678] sm:$0xff]
        %v387 = vld [vmem:[%s153 + $0x680] sm:$0xff]
        %v388 = vld [vmem:[%s153 + $0x688] sm:$0xff]
        %v389 = vld [vmem:[%s153 + $0x690] sm:$0xff]
        %v390 = vld [vmem:[%s153 + $0x698] sm:$0xff]
        %v391 = vld [vmem:[%s153 + $0x6a0] sm:$0xff]
        %v392 = vld [vmem:[%s153 + $0x6a8] sm:$0xff]
        %v393 = vld [vmem:[%s153 + $0x6b0] sm:$0xff]
        %v394 = vld [vmem:[%s153 + $0x6b8] sm:$0xff]
        %v395 = vld [vmem:[%s153 + $0x6c0] sm:$0xff]
        %v396 = vld [vmem:[%s153 + $0x6c8] sm:$0xff]
        %v397 = vld [vmem:[%s153 + $0x6d0] sm:$0xff]
        %v398 = vld [vmem:[%s153 + $0x6d8] sm:$0xff]
        %v399 = vld [vmem:[%s153 + $0x6e0] sm:$0xff]
        %v400 = vld [vmem:[%s153 + $0x6e8] sm:$0xff]
        %v401 = vld [vmem:[%s153 + $0x6f0] sm:$0xff]
        %v402 = vld [vmem:[%s153 + $0x6f8] sm:$0xff]
        %v403 = vld [vmem:[%s153 + $0x700] sm:$0xff]
        %v404 = vld [vmem:[%s153 + $0x708] sm:$0xff]
        %v405 = vld [vmem:[%s153 + $0x710] sm:$0xff]
        %v406 = vld [vmem:[%s153 + $0x718] sm:$0xff]
        %v407 = vld [vmem:[%s153 + $0x720] sm:$0xff]
        %v408 = vld [vmem:[%s153 + $0x728] sm:$0xff]
        %v409 = vld [vmem:[%s153 + $0x730] sm:$0xff]
        %v410 = vld [vmem:[%s153 + $0x738] sm:$0xff]
        %v411 = vld [vmem:[%s153 + $0x740] sm:$0xff]
        %v412 = vld [vmem:[%s153 + $0x748] sm:$0xff]
        %v413 = vld [vmem:[%s153 + $0x750] sm:$0xff]
        %v414 = vld [vmem:[%s153 + $0x758] sm:$0xff]
        %v415 = vld [vmem:[%s153 + $0x760] sm:$0xff]
        %v416 = vld [vmem:[%s153 + $0x768] sm:$0xff]
        %v417 = vld [vmem:[%s153 + $0x770] sm:$0xff]
        %v418 = vld [vmem:[%s153 + $0x778] sm:$0xff]
        %v419 = vld [vmem:[%s153 + $0x780] sm:$0xff]
        %v420 = vld [vmem:[%s153 + $0x788] sm:$0xff]
        %v421 = vld [vmem:[%s153 + $0x790] sm:$0xff]
        %v422 = vld [vmem:[%s153 + $0x798] sm:$0xff]
        %v423 = vld [vmem:[%s153 + $0x7a0] sm:$0xff]
        %v424 = vld [vmem:[%s153 + $0x7a8] sm:$0xff]
        %v425 = vld [vmem:[%s153 + $0x7b0] sm:$0xff]
        %v426 = vld [vmem:[%s153 + $0x7b8] sm:$0xff]
        %v427 = vld [vmem:[%s153 + $0x7c0] sm:$0xff]
        %v428 = vld [vmem:[%s153 + $0x7c8] sm:$0xff]
        %v429 = vld [vmem:[%s153 + $0x7d0] sm:$0xff]
        %v430 = vld [vmem:[%s153 + $0x7d8] sm:$0xff]
        %v431 = vld [vmem:[%s153 + $0x7e0] sm:$0xff]
        %v432 = vld [vmem:[%s153 + $0x7e8] sm:$0xff]
        %v433 = vld [vmem:[%s153 + $0x7f0] sm:$0xff]
        %v434 = vld [vmem:[%s153 + $0x7f8] sm:$0xff]
        %v435 = vstv %s178
        %v436 = vmul.f32 %v435, %v179
        %v437 = vmul.f32 %v435, %v180
        %v438 = vmul.f32 %v435, %v181
        %v439 = vmul.f32 %v435, %v182
        %v440 = vmul.f32 %v435, %v183
        %v441 = vmul.f32 %v435, %v184
        %v442 = vmul.f32 %v435, %v185
        %v443 = vmul.f32 %v435, %v186
        %v444 = vmul.f32 %v435, %v187
        %v445 = vmul.f32 %v435, %v188
        %v446 = vmul.f32 %v435, %v189
        %v447 = vmul.f32 %v435, %v190
        %v448 = vmul.f32 %v435, %v191
        %v449 = vmul.f32 %v435, %v192
        %v450 = vmul.f32 %v435, %v193
        %v451 = vmul.f32 %v435, %v194
        %v452 = vmul.f32 %v435, %v195
        %v453 = vmul.f32 %v435, %v196
        %v454 = vmul.f32 %v435, %v197
        %v455 = vmul.f32 %v435, %v198
        %v456 = vmul.f32 %v435, %v199
        %v457 = vmul.f32 %v435, %v200
        %v458 = vmul.f32 %v435, %v201
        %v459 = vmul.f32 %v435, %v202
        %v460 = vmul.f32 %v435, %v203
        %v461 = vmul.f32 %v435, %v204
        %v462 = vmul.f32 %v435, %v205
        %v463 = vmul.f32 %v435, %v206
        %v464 = vmul.f32 %v435, %v207
        %v465 = vmul.f32 %v435, %v208
        %v466 = vmul.f32 %v435, %v209
        %v467 = vmul.f32 %v435, %v210
        %v468 = vmul.f32 %v435, %v211
        %v469 = vmul.f32 %v435, %v212
        %v470 = vmul.f32 %v435, %v213
        %v471 = vmul.f32 %v435, %v214
        %v472 = vmul.f32 %v435, %v215
        %v473 = vmul.f32 %v435, %v216
        %v474 = vmul.f32 %v435, %v217
        %v475 = vmul.f32 %v435, %v218
        %v476 = vmul.f32 %v435, %v219
        %v477 = vmul.f32 %v435, %v220
        %v478 = vmul.f32 %v435, %v221
        %v479 = vmul.f32 %v435, %v222
        %v480 = vmul.f32 %v435, %v223
        %v481 = vmul.f32 %v435, %v224
        %v482 = vmul.f32 %v435, %v225
        %v483 = vmul.f32 %v435, %v226
        %v484 = vmul.f32 %v435, %v227
        %v485 = vmul.f32 %v435, %v228
        %v486 = vmul.f32 %v435, %v229
        %v487 = vmul.f32 %v435, %v230
        %v488 = vmul.f32 %v435, %v231
        %v489 = vmul.f32 %v435, %v232
        %v490 = vmul.f32 %v435, %v233
        %v491 = vmul.f32 %v435, %v234
        %v492 = vmul.f32 %v435, %v235
        %v493 = vmul.f32 %v435, %v236
        %v494 = vmul.f32 %v435, %v237
        %v495 = vmul.f32 %v435, %v238
        %v496 = vmul.f32 %v435, %v239
        %v497 = vmul.f32 %v435, %v240
        %v498 = vmul.f32 %v435, %v241
        %v499 = vmul.f32 %v435, %v242
        %v500 = vmul.f32 %v435, %v243
        %v501 = vmul.f32 %v435, %v244
        %v502 = vmul.f32 %v435, %v245
        %v503 = vmul.f32 %v435, %v246
        %v504 = vmul.f32 %v435, %v247
        %v505 = vmul.f32 %v435, %v248
        %v506 = vmul.f32 %v435, %v249
        %v507 = vmul.f32 %v435, %v250
        %v508 = vmul.f32 %v435, %v251
        %v509 = vmul.f32 %v435, %v252
        %v510 = vmul.f32 %v435, %v253
        %v511 = vmul.f32 %v435, %v254
        %v512 = vmul.f32 %v435, %v255
        %v513 = vmul.f32 %v435, %v256
        %v514 = vmul.f32 %v435, %v257
        %v515 = vmul.f32 %v435, %v258
        %v516 = vmul.f32 %v435, %v259
        %v517 = vmul.f32 %v435, %v260
        %v518 = vmul.f32 %v435, %v261
        %v519 = vmul.f32 %v435, %v262
        %v520 = vmul.f32 %v435, %v263
        %v521 = vmul.f32 %v435, %v264
        %v522 = vmul.f32 %v435, %v265
        %v523 = vmul.f32 %v435, %v266
        %v524 = vmul.f32 %v435, %v267
        %v525 = vmul.f32 %v435, %v268
        %v526 = vmul.f32 %v435, %v269
        %v527 = vmul.f32 %v435, %v270
        %v528 = vmul.f32 %v435, %v271
        %v529 = vmul.f32 %v435, %v272
        %v530 = vmul.f32 %v435, %v273
        %v531 = vmul.f32 %v435, %v274
        %v532 = vmul.f32 %v435, %v275
        %v533 = vmul.f32 %v435, %v276
        %v534 = vmul.f32 %v435, %v277
        %v535 = vmul.f32 %v435, %v278
        %v536 = vmul.f32 %v435, %v279
        %v537 = vmul.f32 %v435, %v280
        %v538 = vmul.f32 %v435, %v281
        %v539 = vmul.f32 %v435, %v282
        %v540 = vmul.f32 %v435, %v283
        %v541 = vmul.f32 %v435, %v284
        %v542 = vmul.f32 %v435, %v285
        %v543 = vmul.f32 %v435, %v286
        %v544 = vmul.f32 %v435, %v287
        %v545 = vmul.f32 %v435, %v288
        %v546 = vmul.f32 %v435, %v289
        %v547 = vmul.f32 %v435, %v290
        %v548 = vmul.f32 %v435, %v291
        %v549 = vmul.f32 %v435, %v292
        %v550 = vmul.f32 %v435, %v293
        %v551 = vmul.f32 %v435, %v294
        %v552 = vmul.f32 %v435, %v295
        %v553 = vmul.f32 %v435, %v296
        %v554 = vmul.f32 %v435, %v297
        %v555 = vmul.f32 %v435, %v298
        %v556 = vmul.f32 %v435, %v299
        %v557 = vmul.f32 %v435, %v300
        %v558 = vmul.f32 %v435, %v301
        %v559 = vmul.f32 %v435, %v302
        %v560 = vmul.f32 %v435, %v303
        %v561 = vmul.f32 %v435, %v304
        %v562 = vmul.f32 %v435, %v305
        %v563 = vmul.f32 %v435, %v306
        %v564 = vmul.f32 %v435, %v307
        %v565 = vmul.f32 %v435, %v308
        %v566 = vmul.f32 %v435, %v309
        %v567 = vmul.f32 %v435, %v310
        %v568 = vmul.f32 %v435, %v311
        %v569 = vmul.f32 %v435, %v312
        %v570 = vmul.f32 %v435, %v313
        %v571 = vmul.f32 %v435, %v314
        %v572 = vmul.f32 %v435, %v315
        %v573 = vmul.f32 %v435, %v316
        %v574 = vmul.f32 %v435, %v317
        %v575 = vmul.f32 %v435, %v318
        %v576 = vmul.f32 %v435, %v319
        %v577 = vmul.f32 %v435, %v320
        %v578 = vmul.f32 %v435, %v321
        %v579 = vmul.f32 %v435, %v322
        %v580 = vmul.f32 %v435, %v323
        %v581 = vmul.f32 %v435, %v324
        %v582 = vmul.f32 %v435, %v325
        %v583 = vmul.f32 %v435, %v326
        %v584 = vmul.f32 %v435, %v327
        %v585 = vmul.f32 %v435, %v328
        %v586 = vmul.f32 %v435, %v329
        %v587 = vmul.f32 %v435, %v330
        %v588 = vmul.f32 %v435, %v331
        %v589 = vmul.f32 %v435, %v332
        %v590 = vmul.f32 %v435, %v333
        %v591 = vmul.f32 %v435, %v334
        %v592 = vmul.f32 %v435, %v335
        %v593 = vmul.f32 %v435, %v336
        %v594 = vmul.f32 %v435, %v337
        %v595 = vmul.f32 %v435, %v338
        %v596 = vmul.f32 %v435, %v339
        %v597 = vmul.f32 %v435, %v340
        %v598 = vmul.f32 %v435, %v341
        %v599 = vmul.f32 %v435, %v342
        %v600 = vmul.f32 %v435, %v343
        %v601 = vmul.f32 %v435, %v344
        %v602 = vmul.f32 %v435, %v345
        %v603 = vmul.f32 %v435, %v346
        %v604 = vmul.f32 %v435, %v347
        %v605 = vmul.f32 %v435, %v348
        %v606 = vmul.f32 %v435, %v349
        %v607 = vmul.f32 %v435, %v350
        %v608 = vmul.f32 %v435, %v351
        %v609 = vmul.f32 %v435, %v352
        %v610 = vmul.f32 %v435, %v353
        %v611 = vmul.f32 %v435, %v354
        %v612 = vmul.f32 %v435, %v355
        %v613 = vmul.f32 %v435, %v356
        %v614 = vmul.f32 %v435, %v357
        %v615 = vmul.f32 %v435, %v358
        %v616 = vmul.f32 %v435, %v359
        %v617 = vmul.f32 %v435, %v360
        %v618 = vmul.f32 %v435, %v361
        %v619 = vmul.f32 %v435, %v362
        %v620 = vmul.f32 %v435, %v363
        %v621 = vmul.f32 %v435, %v364
        %v622 = vmul.f32 %v435, %v365
        %v623 = vmul.f32 %v435, %v366
        %v624 = vmul.f32 %v435, %v367
        %v625 = vmul.f32 %v435, %v368
        %v626 = vmul.f32 %v435, %v369
        %v627 = vmul.f32 %v435, %v370
        %v628 = vmul.f32 %v435, %v371
        %v629 = vmul.f32 %v435, %v372
        %v630 = vmul.f32 %v435, %v373
        %v631 = vmul.f32 %v435, %v374
        %v632 = vmul.f32 %v435, %v375
        %v633 = vmul.f32 %v435, %v376
        %v634 = vmul.f32 %v435, %v377
        %v635 = vmul.f32 %v435, %v378
        %v636 = vmul.f32 %v435, %v379
        %v637 = vmul.f32 %v435, %v380
        %v638 = vmul.f32 %v435, %v381
        %v639 = vmul.f32 %v435, %v382
        %v640 = vmul.f32 %v435, %v383
        %v641 = vmul.f32 %v435, %v384
        %v642 = vmul.f32 %v435, %v385
        %v643 = vmul.f32 %v435, %v386
        %v644 = vmul.f32 %v435, %v387
        %v645 = vmul.f32 %v435, %v388
        %v646 = vmul.f32 %v435, %v389
        %v647 = vmul.f32 %v435, %v390
        %v648 = vmul.f32 %v435, %v391
        %v649 = vmul.f32 %v435, %v392
        %v650 = vmul.f32 %v435, %v393
        %v651 = vmul.f32 %v435, %v394
        %v652 = vmul.f32 %v435, %v395
        %v653 = vmul.f32 %v435, %v396
        %v654 = vmul.f32 %v435, %v397
        %v655 = vmul.f32 %v435, %v398
        %v656 = vmul.f32 %v435, %v399
        %v657 = vmul.f32 %v435, %v400
        %v658 = vmul.f32 %v435, %v401
        %v659 = vmul.f32 %v435, %v402
        %v660 = vmul.f32 %v435, %v403
        %v661 = vmul.f32 %v435, %v404
        %v662 = vmul.f32 %v435, %v405
        %v663 = vmul.f32 %v435, %v406
        %v664 = vmul.f32 %v435, %v407
        %v665 = vmul.f32 %v435, %v408
        %v666 = vmul.f32 %v435, %v409
        %v667 = vmul.f32 %v435, %v410
        %v668 = vmul.f32 %v435, %v411
        %v669 = vmul.f32 %v435, %v412
        %v670 = vmul.f32 %v435, %v413
        %v671 = vmul.f32 %v435, %v414
        %v672 = vmul.f32 %v435, %v415
        %v673 = vmul.f32 %v435, %v416
        %v674 = vmul.f32 %v435, %v417
        %v675 = vmul.f32 %v435, %v418
        %v676 = vmul.f32 %v435, %v419
        %v677 = vmul.f32 %v435, %v420
        %v678 = vmul.f32 %v435, %v421
        %v679 = vmul.f32 %v435, %v422
        %v680 = vmul.f32 %v435, %v423
        %v681 = vmul.f32 %v435, %v424
        %v682 = vmul.f32 %v435, %v425
        %v683 = vmul.f32 %v435, %v426
        %v684 = vmul.f32 %v435, %v427
        %v685 = vmul.f32 %v435, %v428
        %v686 = vmul.f32 %v435, %v429
        %v687 = vmul.f32 %v435, %v430
        %v688 = vmul.f32 %v435, %v431
        %v689 = vmul.f32 %v435, %v432
        %v690 = vmul.f32 %v435, %v433
        %v691 = vmul.f32 %v435, %v434
        %v692 = vstv %s177
        %v693 = vadd.f32 %v692, %v436
        %v694 = vadd.f32 %v692, %v437
        %v695 = vadd.f32 %v692, %v438
        %v696 = vadd.f32 %v692, %v439
        %v697 = vadd.f32 %v692, %v440
        %v698 = vadd.f32 %v692, %v441
        %v699 = vadd.f32 %v692, %v442
        %v700 = vadd.f32 %v692, %v443
        %v701 = vadd.f32 %v692, %v444
        %v702 = vadd.f32 %v692, %v445
        %v703 = vadd.f32 %v692, %v446
        %v704 = vadd.f32 %v692, %v447
        %v705 = vadd.f32 %v692, %v448
        %v706 = vadd.f32 %v692, %v449
        %v707 = vadd.f32 %v692, %v450
        %v708 = vadd.f32 %v692, %v451
        %v709 = vadd.f32 %v692, %v452
        %v710 = vadd.f32 %v692, %v453
        %v711 = vadd.f32 %v692, %v454
        %v712 = vadd.f32 %v692, %v455
        %v713 = vadd.f32 %v692, %v456
        %v714 = vadd.f32 %v692, %v457
        %v715 = vadd.f32 %v692, %v458
        %v716 = vadd.f32 %v692, %v459
        %v717 = vadd.f32 %v692, %v460
        %v718 = vadd.f32 %v692, %v461
        %v719 = vadd.f32 %v692, %v462
        %v720 = vadd.f32 %v692, %v463
        %v721 = vadd.f32 %v692, %v464
        %v722 = vadd.f32 %v692, %v465
        %v723 = vadd.f32 %v692, %v466
        %v724 = vadd.f32 %v692, %v467
        %v725 = vadd.f32 %v692, %v468
        %v726 = vadd.f32 %v692, %v469
        %v727 = vadd.f32 %v692, %v470
        %v728 = vadd.f32 %v692, %v471
        %v729 = vadd.f32 %v692, %v472
        %v730 = vadd.f32 %v692, %v473
        %v731 = vadd.f32 %v692, %v474
        %v732 = vadd.f32 %v692, %v475
        %v733 = vadd.f32 %v692, %v476
        %v734 = vadd.f32 %v692, %v477
        %v735 = vadd.f32 %v692, %v478
        %v736 = vadd.f32 %v692, %v479
        %v737 = vadd.f32 %v692, %v480
        %v738 = vadd.f32 %v692, %v481
        %v739 = vadd.f32 %v692, %v482
        %v740 = vadd.f32 %v692, %v483
        %v741 = vadd.f32 %v692, %v484
        %v742 = vadd.f32 %v692, %v485
        %v743 = vadd.f32 %v692, %v486
        %v744 = vadd.f32 %v692, %v487
        %v745 = vadd.f32 %v692, %v488
        %v746 = vadd.f32 %v692, %v489
        %v747 = vadd.f32 %v692, %v490
        %v748 = vadd.f32 %v692, %v491
        %v749 = vadd.f32 %v692, %v492
        %v750 = vadd.f32 %v692, %v493
        %v751 = vadd.f32 %v692, %v494
        %v752 = vadd.f32 %v692, %v495
        %v753 = vadd.f32 %v692, %v496
        %v754 = vadd.f32 %v692, %v497
        %v755 = vadd.f32 %v692, %v498
        %v756 = vadd.f32 %v692, %v499
        %v757 = vadd.f32 %v692, %v500
        %v758 = vadd.f32 %v692, %v501
        %v759 = vadd.f32 %v692, %v502
        %v760 = vadd.f32 %v692, %v503
        %v761 = vadd.f32 %v692, %v504
        %v762 = vadd.f32 %v692, %v505
        %v763 = vadd.f32 %v692, %v506
        %v764 = vadd.f32 %v692, %v507
        %v765 = vadd.f32 %v692, %v508
        %v766 = vadd.f32 %v692, %v509
        %v767 = vadd.f32 %v692, %v510
        %v768 = vadd.f32 %v692, %v511
        %v769 = vadd.f32 %v692, %v512
        %v770 = vadd.f32 %v692, %v513
        %v771 = vadd.f32 %v692, %v514
        %v772 = vadd.f32 %v692, %v515
        %v773 = vadd.f32 %v692, %v516
        %v774 = vadd.f32 %v692, %v517
        %v775 = vadd.f32 %v692, %v518
        %v776 = vadd.f32 %v692, %v519
        %v777 = vadd.f32 %v692, %v520
        %v778 = vadd.f32 %v692, %v521
        %v779 = vadd.f32 %v692, %v522
        %v780 = vadd.f32 %v692, %v523
        %v781 = vadd.f32 %v692, %v524
        %v782 = vadd.f32 %v692, %v525
        %v783 = vadd.f32 %v692, %v526
        %v784 = vadd.f32 %v692, %v527
        %v785 = vadd.f32 %v692, %v528
        %v786 = vadd.f32 %v692, %v529
        %v787 = vadd.f32 %v692, %v530
        %v788 = vadd.f32 %v692, %v531
        %v789 = vadd.f32 %v692, %v532
        %v790 = vadd.f32 %v692, %v533
        %v791 = vadd.f32 %v692, %v534
        %v792 = vadd.f32 %v692, %v535
        %v793 = vadd.f32 %v692, %v536
        %v794 = vadd.f32 %v692, %v537
        %v795 = vadd.f32 %v692, %v538
        %v796 = vadd.f32 %v692, %v539
        %v797 = vadd.f32 %v692, %v540
        %v798 = vadd.f32 %v692, %v541
        %v799 = vadd.f32 %v692, %v542
        %v800 = vadd.f32 %v692, %v543
        %v801 = vadd.f32 %v692, %v544
        %v802 = vadd.f32 %v692, %v545
        %v803 = vadd.f32 %v692, %v546
        %v804 = vadd.f32 %v692, %v547
        %v805 = vadd.f32 %v692, %v548
        %v806 = vadd.f32 %v692, %v549
        %v807 = vadd.f32 %v692, %v550
        %v808 = vadd.f32 %v692, %v551
        %v809 = vadd.f32 %v692, %v552
        %v810 = vadd.f32 %v692, %v553
        %v811 = vadd.f32 %v692, %v554
        %v812 = vadd.f32 %v692, %v555
        %v813 = vadd.f32 %v692, %v556
        %v814 = vadd.f32 %v692, %v557
        %v815 = vadd.f32 %v692, %v558
        %v816 = vadd.f32 %v692, %v559
        %v817 = vadd.f32 %v692, %v560
        %v818 = vadd.f32 %v692, %v561
        %v819 = vadd.f32 %v692, %v562
        %v820 = vadd.f32 %v692, %v563
        %v821 = vadd.f32 %v692, %v564
        %v822 = vadd.f32 %v692, %v565
        %v823 = vadd.f32 %v692, %v566
        %v824 = vadd.f32 %v692, %v567
        %v825 = vadd.f32 %v692, %v568
        %v826 = vadd.f32 %v692, %v569
        %v827 = vadd.f32 %v692, %v570
        %v828 = vadd.f32 %v692, %v571
        %v829 = vadd.f32 %v692, %v572
        %v830 = vadd.f32 %v692, %v573
        %v831 = vadd.f32 %v692, %v574
        %v832 = vadd.f32 %v692, %v575
        %v833 = vadd.f32 %v692, %v576
        %v834 = vadd.f32 %v692, %v577
        %v835 = vadd.f32 %v692, %v578
        %v836 = vadd.f32 %v692, %v579
        %v837 = vadd.f32 %v692, %v580
        %v838 = vadd.f32 %v692, %v581
        %v839 = vadd.f32 %v692, %v582
        %v840 = vadd.f32 %v692, %v583
        %v841 = vadd.f32 %v692, %v584
        %v842 = vadd.f32 %v692, %v585
        %v843 = vadd.f32 %v692, %v586
        %v844 = vadd.f32 %v692, %v587
        %v845 = vadd.f32 %v692, %v588
        %v846 = vadd.f32 %v692, %v589
        %v847 = vadd.f32 %v692, %v590
        %v848 = vadd.f32 %v692, %v591
        %v849 = vadd.f32 %v692, %v592
        %v850 = vadd.f32 %v692, %v593
        %v851 = vadd.f32 %v692, %v594
        %v852 = vadd.f32 %v692, %v595
        %v853 = vadd.f32 %v692, %v596
        %v854 = vadd.f32 %v692, %v597
        %v855 = vadd.f32 %v692, %v598
        %v856 = vadd.f32 %v692, %v599
        %v857 = vadd.f32 %v692, %v600
        %v858 = vadd.f32 %v692, %v601
        %v859 = vadd.f32 %v692, %v602
        %v860 = vadd.f32 %v692, %v603
        %v861 = vadd.f32 %v692, %v604
        %v862 = vadd.f32 %v692, %v605
        %v863 = vadd.f32 %v692, %v606
        %v864 = vadd.f32 %v692, %v607
        %v865 = vadd.f32 %v692, %v608
        %v866 = vadd.f32 %v692, %v609
        %v867 = vadd.f32 %v692, %v610
        %v868 = vadd.f32 %v692, %v611
        %v869 = vadd.f32 %v692, %v612
        %v870 = vadd.f32 %v692, %v613
        %v871 = vadd.f32 %v692, %v614
        %v872 = vadd.f32 %v692, %v615
        %v873 = vadd.f32 %v692, %v616
        %v874 = vadd.f32 %v692, %v617
        %v875 = vadd.f32 %v692, %v618
        %v876 = vadd.f32 %v692, %v619
        %v877 = vadd.f32 %v692, %v620
        %v878 = vadd.f32 %v692, %v621
        %v879 = vadd.f32 %v692, %v622
        %v880 = vadd.f32 %v692, %v623
        %v881 = vadd.f32 %v692, %v624
        %v882 = vadd.f32 %v692, %v625
        %v883 = vadd.f32 %v692, %v626
        %v884 = vadd.f32 %v692, %v627
        %v885 = vadd.f32 %v692, %v628
        %v886 = vadd.f32 %v692, %v629
        %v887 = vadd.f32 %v692, %v630
        %v888 = vadd.f32 %v692, %v631
        %v889 = vadd.f32 %v692, %v632
        %v890 = vadd.f32 %v692, %v633
        %v891 = vadd.f32 %v692, %v634
        %v892 = vadd.f32 %v692, %v635
        %v893 = vadd.f32 %v692, %v636
        %v894 = vadd.f32 %v692, %v637
        %v895 = vadd.f32 %v692, %v638
        %v896 = vadd.f32 %v692, %v639
        %v897 = vadd.f32 %v692, %v640
        %v898 = vadd.f32 %v692, %v641
        %v899 = vadd.f32 %v692, %v642
        %v900 = vadd.f32 %v692, %v643
        %v901 = vadd.f32 %v692, %v644
        %v902 = vadd.f32 %v692, %v645
        %v903 = vadd.f32 %v692, %v646
        %v904 = vadd.f32 %v692, %v647
        %v905 = vadd.f32 %v692, %v648
        %v906 = vadd.f32 %v692, %v649
        %v907 = vadd.f32 %v692, %v650
        %v908 = vadd.f32 %v692, %v651
        %v909 = vadd.f32 %v692, %v652
        %v910 = vadd.f32 %v692, %v653
        %v911 = vadd.f32 %v692, %v654
        %v912 = vadd.f32 %v692, %v655
        %v913 = vadd.f32 %v692, %v656
        %v914 = vadd.f32 %v692, %v657
        %v915 = vadd.f32 %v692, %v658
        %v916 = vadd.f32 %v692, %v659
        %v917 = vadd.f32 %v692, %v660
        %v918 = vadd.f32 %v692, %v661
        %v919 = vadd.f32 %v692, %v662
        %v920 = vadd.f32 %v692, %v663
        %v921 = vadd.f32 %v692, %v664
        %v922 = vadd.f32 %v692, %v665
        %v923 = vadd.f32 %v692, %v666
        %v924 = vadd.f32 %v692, %v667
        %v925 = vadd.f32 %v692, %v668
        %v926 = vadd.f32 %v692, %v669
        %v927 = vadd.f32 %v692, %v670
        %v928 = vadd.f32 %v692, %v671
        %v929 = vadd.f32 %v692, %v672
        %v930 = vadd.f32 %v692, %v673
        %v931 = vadd.f32 %v692, %v674
        %v932 = vadd.f32 %v692, %v675
        %v933 = vadd.f32 %v692, %v676
        %v934 = vadd.f32 %v692, %v677
        %v935 = vadd.f32 %v692, %v678
        %v936 = vadd.f32 %v692, %v679
        %v937 = vadd.f32 %v692, %v680
        %v938 = vadd.f32 %v692, %v681
        %v939 = vadd.f32 %v692, %v682
        %v940 = vadd.f32 %v692, %v683
        %v941 = vadd.f32 %v692, %v684
        %v942 = vadd.f32 %v692, %v685
        %v943 = vadd.f32 %v692, %v686
        %v944 = vadd.f32 %v692, %v687
        %v945 = vadd.f32 %v692, %v688
        %v946 = vadd.f32 %v692, %v689
        %v947 = vadd.f32 %v692, %v690
        %v948 = vadd.f32 %v692, %v691
        %949 = vst [vmem:[%s174] sm:$0xff] %v693
        %950 = vst [vmem:[%s174 + $0x8] sm:$0xff] %v694
        %951 = vst [vmem:[%s174 + $0x10] sm:$0xff] %v695
        %952 = vst [vmem:[%s174 + $0x18] sm:$0xff] %v696
        %953 = vst [vmem:[%s174 + $0x20] sm:$0xff] %v697
        %954 = vst [vmem:[%s174 + $0x28] sm:$0xff] %v698
        %955 = vst [vmem:[%s174 + $0x30] sm:$0xff] %v699
        %956 = vst [vmem:[%s174 + $0x38] sm:$0xff] %v700
        %957 = vst [vmem:[%s174 + $0x40] sm:$0xff] %v701
        %958 = vst [vmem:[%s174 + $0x48] sm:$0xff] %v702
        %959 = vst [vmem:[%s174 + $0x50] sm:$0xff] %v703
        %960 = vst [vmem:[%s174 + $0x58] sm:$0xff] %v704
        %961 = vst [vmem:[%s174 + $0x60] sm:$0xff] %v705
        %962 = vst [vmem:[%s174 + $0x68] sm:$0xff] %v706
        %963 = vst [vmem:[%s174 + $0x70] sm:$0xff] %v707
        %964 = vst [vmem:[%s174 + $0x78] sm:$0xff] %v708
        %965 = vst [vmem:[%s174 + $0x80] sm:$0xff] %v709
        %966 = vst [vmem:[%s174 + $0x88] sm:$0xff] %v710
        %967 = vst [vmem:[%s174 + $0x90] sm:$0xff] %v711
        %968 = vst [vmem:[%s174 + $0x98] sm:$0xff] %v712
        %969 = vst [vmem:[%s174 + $0xa0] sm:$0xff] %v713
        %970 = vst [vmem:[%s174 + $0xa8] sm:$0xff] %v714
        %971 = vst [vmem:[%s174 + $0xb0] sm:$0xff] %v715
        %972 = vst [vmem:[%s174 + $0xb8] sm:$0xff] %v716
        %973 = vst [vmem:[%s174 + $0xc0] sm:$0xff] %v717
        %974 = vst [vmem:[%s174 + $0xc8] sm:$0xff] %v718
        %975 = vst [vmem:[%s174 + $0xd0] sm:$0xff] %v719
        %976 = vst [vmem:[%s174 + $0xd8] sm:$0xff] %v720
        %977 = vst [vmem:[%s174 + $0xe0] sm:$0xff] %v721
        %978 = vst [vmem:[%s174 + $0xe8] sm:$0xff] %v722
        %979 = vst [vmem:[%s174 + $0xf0] sm:$0xff] %v723
        %980 = vst [vmem:[%s174 + $0xf8] sm:$0xff] %v724
        %981 = vst [vmem:[%s174 + $0x100] sm:$0xff] %v725
        %982 = vst [vmem:[%s174 + $0x108] sm:$0xff] %v726
        %983 = vst [vmem:[%s174 + $0x110] sm:$0xff] %v727
        %984 = vst [vmem:[%s174 + $0x118] sm:$0xff] %v728
        %985 = vst [vmem:[%s174 + $0x120] sm:$0xff] %v729
        %986 = vst [vmem:[%s174 + $0x128] sm:$0xff] %v730
        %987 = vst [vmem:[%s174 + $0x130] sm:$0xff] %v731
        %988 = vst [vmem:[%s174 + $0x138] sm:$0xff] %v732
        %989 = vst [vmem:[%s174 + $0x140] sm:$0xff] %v733
        %990 = vst [vmem:[%s174 + $0x148] sm:$0xff] %v734
        %991 = vst [vmem:[%s174 + $0x150] sm:$0xff] %v735
        %992 = vst [vmem:[%s174 + $0x158] sm:$0xff] %v736
        %993 = vst [vmem:[%s174 + $0x160] sm:$0xff] %v737
        %994 = vst [vmem:[%s174 + $0x168] sm:$0xff] %v738
        %995 = vst [vmem:[%s174 + $0x170] sm:$0xff] %v739
        %996 = vst [vmem:[%s174 + $0x178] sm:$0xff] %v740
        %997 = vst [vmem:[%s174 + $0x180] sm:$0xff] %v741
        %998 = vst [vmem:[%s174 + $0x188] sm:$0xff] %v742
        %999 = vst [vmem:[%s174 + $0x190] sm:$0xff] %v743
        %1000 = vst [vmem:[%s174 + $0x198] sm:$0xff] %v744
        %1001 = vst [vmem:[%s174 + $0x1a0] sm:$0xff] %v745
        %1002 = vst [vmem:[%s174 + $0x1a8] sm:$0xff] %v746
        %1003 = vst [vmem:[%s174 + $0x1b0] sm:$0xff] %v747
        %1004 = vst [vmem:[%s174 + $0x1b8] sm:$0xff] %v748
        %1005 = vst [vmem:[%s174 + $0x1c0] sm:$0xff] %v749
        %1006 = vst [vmem:[%s174 + $0x1c8] sm:$0xff] %v750
        %1007 = vst [vmem:[%s174 + $0x1d0] sm:$0xff] %v751
        %1008 = vst [vmem:[%s174 + $0x1d8] sm:$0xff] %v752
        %1009 = vst [vmem:[%s174 + $0x1e0] sm:$0xff] %v753
        %1010 = vst [vmem:[%s174 + $0x1e8] sm:$0xff] %v754
        %1011 = vst [vmem:[%s174 + $0x1f0] sm:$0xff] %v755
        %1012 = vst [vmem:[%s174 + $0x1f8] sm:$0xff] %v756
        %1013 = vst [vmem:[%s174 + $0x200] sm:$0xff] %v757
        %1014 = vst [vmem:[%s174 + $0x208] sm:$0xff] %v758
        %1015 = vst [vmem:[%s174 + $0x210] sm:$0xff] %v759
        %1016 = vst [vmem:[%s174 + $0x218] sm:$0xff] %v760
        %1017 = vst [vmem:[%s174 + $0x220] sm:$0xff] %v761
        %1018 = vst [vmem:[%s174 + $0x228] sm:$0xff] %v762
        %1019 = vst [vmem:[%s174 + $0x230] sm:$0xff] %v763
        %1020 = vst [vmem:[%s174 + $0x238] sm:$0xff] %v764
        %1021 = vst [vmem:[%s174 + $0x240] sm:$0xff] %v765
        %1022 = vst [vmem:[%s174 + $0x248] sm:$0xff] %v766
        %1023 = vst [vmem:[%s174 + $0x250] sm:$0xff] %v767
        %1024 = vst [vmem:[%s174 + $0x258] sm:$0xff] %v768
        %1025 = vst [vmem:[%s174 + $0x260] sm:$0xff] %v769
        %1026 = vst [vmem:[%s174 + $0x268] sm:$0xff] %v770
        %1027 = vst [vmem:[%s174 + $0x270] sm:$0xff] %v771
        %1028 = vst [vmem:[%s174 + $0x278] sm:$0xff] %v772
        %1029 = vst [vmem:[%s174 + $0x280] sm:$0xff] %v773
        %1030 = vst [vmem:[%s174 + $0x288] sm:$0xff] %v774
        %1031 = vst [vmem:[%s174 + $0x290] sm:$0xff] %v775
        %1032 = vst [vmem:[%s174 + $0x298] sm:$0xff] %v776
        %1033 = vst [vmem:[%s174 + $0x2a0] sm:$0xff] %v777
        %1034 = vst [vmem:[%s174 + $0x2a8] sm:$0xff] %v778
        %1035 = vst [vmem:[%s174 + $0x2b0] sm:$0xff] %v779
        %1036 = vst [vmem:[%s174 + $0x2b8] sm:$0xff] %v780
        %1037 = vst [vmem:[%s174 + $0x2c0] sm:$0xff] %v781
        %1038 = vst [vmem:[%s174 + $0x2c8] sm:$0xff] %v782
        %1039 = vst [vmem:[%s174 + $0x2d0] sm:$0xff] %v783
        %1040 = vst [vmem:[%s174 + $0x2d8] sm:$0xff] %v784
        %1041 = vst [vmem:[%s174 + $0x2e0] sm:$0xff] %v785
        %1042 = vst [vmem:[%s174 + $0x2e8] sm:$0xff] %v786
        %1043 = vst [vmem:[%s174 + $0x2f0] sm:$0xff] %v787
        %1044 = vst [vmem:[%s174 + $0x2f8] sm:$0xff] %v788
        %1045 = vst [vmem:[%s174 + $0x300] sm:$0xff] %v789
        %1046 = vst [vmem:[%s174 + $0x308] sm:$0xff] %v790
        %1047 = vst [vmem:[%s174 + $0x310] sm:$0xff] %v791
        %1048 = vst [vmem:[%s174 + $0x318] sm:$0xff] %v792
        %1049 = vst [vmem:[%s174 + $0x320] sm:$0xff] %v793
        %1050 = vst [vmem:[%s174 + $0x328] sm:$0xff] %v794
        %1051 = vst [vmem:[%s174 + $0x330] sm:$0xff] %v795
        %1052 = vst [vmem:[%s174 + $0x338] sm:$0xff] %v796
        %1053 = vst [vmem:[%s174 + $0x340] sm:$0xff] %v797
        %1054 = vst [vmem:[%s174 + $0x348] sm:$0xff] %v798
        %1055 = vst [vmem:[%s174 + $0x350] sm:$0xff] %v799
        %1056 = vst [vmem:[%s174 + $0x358] sm:$0xff] %v800
        %1057 = vst [vmem:[%s174 + $0x360] sm:$0xff] %v801
        %1058 = vst [vmem:[%s174 + $0x368] sm:$0xff] %v802
        %1059 = vst [vmem:[%s174 + $0x370] sm:$0xff] %v803
        %1060 = vst [vmem:[%s174 + $0x378] sm:$0xff] %v804
        %1061 = vst [vmem:[%s174 + $0x380] sm:$0xff] %v805
        %1062 = vst [vmem:[%s174 + $0x388] sm:$0xff] %v806
        %1063 = vst [vmem:[%s174 + $0x390] sm:$0xff] %v807
        %1064 = vst [vmem:[%s174 + $0x398] sm:$0xff] %v808
        %1065 = vst [vmem:[%s174 + $0x3a0] sm:$0xff] %v809
        %1066 = vst [vmem:[%s174 + $0x3a8] sm:$0xff] %v810
        %1067 = vst [vmem:[%s174 + $0x3b0] sm:$0xff] %v811
        %1068 = vst [vmem:[%s174 + $0x3b8] sm:$0xff] %v812
        %1069 = vst [vmem:[%s174 + $0x3c0] sm:$0xff] %v813
        %1070 = vst [vmem:[%s174 + $0x3c8] sm:$0xff] %v814
        %1071 = vst [vmem:[%s174 + $0x3d0] sm:$0xff] %v815
        %1072 = vst [vmem:[%s174 + $0x3d8] sm:$0xff] %v816
        %1073 = vst [vmem:[%s174 + $0x3e0] sm:$0xff] %v817
        %1074 = vst [vmem:[%s174 + $0x3e8] sm:$0xff] %v818
        %1075 = vst [vmem:[%s174 + $0x3f0] sm:$0xff] %v819
        %1076 = vst [vmem:[%s174 + $0x3f8] sm:$0xff] %v820
        %1077 = vst [vmem:[%s174 + $0x400] sm:$0xff] %v821
        %1078 = vst [vmem:[%s174 + $0x408] sm:$0xff] %v822
        %1079 = vst [vmem:[%s174 + $0x410] sm:$0xff] %v823
        %1080 = vst [vmem:[%s174 + $0x418] sm:$0xff] %v824
        %1081 = vst [vmem:[%s174 + $0x420] sm:$0xff] %v825
        %1082 = vst [vmem:[%s174 + $0x428] sm:$0xff] %v826
        %1083 = vst [vmem:[%s174 + $0x430] sm:$0xff] %v827
        %1084 = vst [vmem:[%s174 + $0x438] sm:$0xff] %v828
        %1085 = vst [vmem:[%s174 + $0x440] sm:$0xff] %v829
        %1086 = vst [vmem:[%s174 + $0x448] sm:$0xff] %v830
        %1087 = vst [vmem:[%s174 + $0x450] sm:$0xff] %v831
        %1088 = vst [vmem:[%s174 + $0x458] sm:$0xff] %v832
        %1089 = vst [vmem:[%s174 + $0x460] sm:$0xff] %v833
        %1090 = vst [vmem:[%s174 + $0x468] sm:$0xff] %v834
        %1091 = vst [vmem:[%s174 + $0x470] sm:$0xff] %v835
        %1092 = vst [vmem:[%s174 + $0x478] sm:$0xff] %v836
        %1093 = vst [vmem:[%s174 + $0x480] sm:$0xff] %v837
        %1094 = vst [vmem:[%s174 + $0x488] sm:$0xff] %v838
        %1095 = vst [vmem:[%s174 + $0x490] sm:$0xff] %v839
        %1096 = vst [vmem:[%s174 + $0x498] sm:$0xff] %v840
        %1097 = vst [vmem:[%s174 + $0x4a0] sm:$0xff] %v841
        %1098 = vst [vmem:[%s174 + $0x4a8] sm:$0xff] %v842
        %1099 = vst [vmem:[%s174 + $0x4b0] sm:$0xff] %v843
        %1100 = vst [vmem:[%s174 + $0x4b8] sm:$0xff] %v844
        %1101 = vst [vmem:[%s174 + $0x4c0] sm:$0xff] %v845
        %1102 = vst [vmem:[%s174 + $0x4c8] sm:$0xff] %v846
        %1103 = vst [vmem:[%s174 + $0x4d0] sm:$0xff] %v847
        %1104 = vst [vmem:[%s174 + $0x4d8] sm:$0xff] %v848
        %1105 = vst [vmem:[%s174 + $0x4e0] sm:$0xff] %v849
        %1106 = vst [vmem:[%s174 + $0x4e8] sm:$0xff] %v850
        %1107 = vst [vmem:[%s174 + $0x4f0] sm:$0xff] %v851
        %1108 = vst [vmem:[%s174 + $0x4f8] sm:$0xff] %v852
        %1109 = vst [vmem:[%s174 + $0x500] sm:$0xff] %v853
        %1110 = vst [vmem:[%s174 + $0x508] sm:$0xff] %v854
        %1111 = vst [vmem:[%s174 + $0x510] sm:$0xff] %v855
        %1112 = vst [vmem:[%s174 + $0x518] sm:$0xff] %v856
        %1113 = vst [vmem:[%s174 + $0x520] sm:$0xff] %v857
        %1114 = vst [vmem:[%s174 + $0x528] sm:$0xff] %v858
        %1115 = vst [vmem:[%s174 + $0x530] sm:$0xff] %v859
        %1116 = vst [vmem:[%s174 + $0x538] sm:$0xff] %v860
        %1117 = vst [vmem:[%s174 + $0x540] sm:$0xff] %v861
        %1118 = vst [vmem:[%s174 + $0x548] sm:$0xff] %v862
        %1119 = vst [vmem:[%s174 + $0x550] sm:$0xff] %v863
        %1120 = vst [vmem:[%s174 + $0x558] sm:$0xff] %v864
        %1121 = vst [vmem:[%s174 + $0x560] sm:$0xff] %v865
        %1122 = vst [vmem:[%s174 + $0x568] sm:$0xff] %v866
        %1123 = vst [vmem:[%s174 + $0x570] sm:$0xff] %v867
        %1124 = vst [vmem:[%s174 + $0x578] sm:$0xff] %v868
        %1125 = vst [vmem:[%s174 + $0x580] sm:$0xff] %v869
        %1126 = vst [vmem:[%s174 + $0x588] sm:$0xff] %v870
        %1127 = vst [vmem:[%s174 + $0x590] sm:$0xff] %v871
        %1128 = vst [vmem:[%s174 + $0x598] sm:$0xff] %v872
        %1129 = vst [vmem:[%s174 + $0x5a0] sm:$0xff] %v873
        %1130 = vst [vmem:[%s174 + $0x5a8] sm:$0xff] %v874
        %1131 = vst [vmem:[%s174 + $0x5b0] sm:$0xff] %v875
        %1132 = vst [vmem:[%s174 + $0x5b8] sm:$0xff] %v876
        %1133 = vst [vmem:[%s174 + $0x5c0] sm:$0xff] %v877
        %1134 = vst [vmem:[%s174 + $0x5c8] sm:$0xff] %v878
        %1135 = vst [vmem:[%s174 + $0x5d0] sm:$0xff] %v879
        %1136 = vst [vmem:[%s174 + $0x5d8] sm:$0xff] %v880
        %1137 = vst [vmem:[%s174 + $0x5e0] sm:$0xff] %v881
        %1138 = vst [vmem:[%s174 + $0x5e8] sm:$0xff] %v882
        %1139 = vst [vmem:[%s174 + $0x5f0] sm:$0xff] %v883
        %1140 = vst [vmem:[%s174 + $0x5f8] sm:$0xff] %v884
        %1141 = vst [vmem:[%s174 + $0x600] sm:$0xff] %v885
        %1142 = vst [vmem:[%s174 + $0x608] sm:$0xff] %v886
        %1143 = vst [vmem:[%s174 + $0x610] sm:$0xff] %v887
        %1144 = vst [vmem:[%s174 + $0x618] sm:$0xff] %v888
        %1145 = vst [vmem:[%s174 + $0x620] sm:$0xff] %v889
        %1146 = vst [vmem:[%s174 + $0x628] sm:$0xff] %v890
        %1147 = vst [vmem:[%s174 + $0x630] sm:$0xff] %v891
        %1148 = vst [vmem:[%s174 + $0x638] sm:$0xff] %v892
        %1149 = vst [vmem:[%s174 + $0x640] sm:$0xff] %v893
        %1150 = vst [vmem:[%s174 + $0x648] sm:$0xff] %v894
        %1151 = vst [vmem:[%s174 + $0x650] sm:$0xff] %v895
        %1152 = vst [vmem:[%s174 + $0x658] sm:$0xff] %v896
        %1153 = vst [vmem:[%s174 + $0x660] sm:$0xff] %v897
        %1154 = vst [vmem:[%s174 + $0x668] sm:$0xff] %v898
        %1155 = vst [vmem:[%s174 + $0x670] sm:$0xff] %v899
        %1156 = vst [vmem:[%s174 + $0x678] sm:$0xff] %v900
        %1157 = vst [vmem:[%s174 + $0x680] sm:$0xff] %v901
        %1158 = vst [vmem:[%s174 + $0x688] sm:$0xff] %v902
        %1159 = vst [vmem:[%s174 + $0x690] sm:$0xff] %v903
        %1160 = vst [vmem:[%s174 + $0x698] sm:$0xff] %v904
        %1161 = vst [vmem:[%s174 + $0x6a0] sm:$0xff] %v905
        %1162 = vst [vmem:[%s174 + $0x6a8] sm:$0xff] %v906
        %1163 = vst [vmem:[%s174 + $0x6b0] sm:$0xff] %v907
        %1164 = vst [vmem:[%s174 + $0x6b8] sm:$0xff] %v908
        %1165 = vst [vmem:[%s174 + $0x6c0] sm:$0xff] %v909
        %1166 = vst [vmem:[%s174 + $0x6c8] sm:$0xff] %v910
        %1167 = vst [vmem:[%s174 + $0x6d0] sm:$0xff] %v911
        %1168 = vst [vmem:[%s174 + $0x6d8] sm:$0xff] %v912
        %1169 = vst [vmem:[%s174 + $0x6e0] sm:$0xff] %v913
        %1170 = vst [vmem:[%s174 + $0x6e8] sm:$0xff] %v914
        %1171 = vst [vmem:[%s174 + $0x6f0] sm:$0xff] %v915
        %1172 = vst [vmem:[%s174 + $0x6f8] sm:$0xff] %v916
        %1173 = vst [vmem:[%s174 + $0x700] sm:$0xff] %v917
        %1174 = vst [vmem:[%s174 + $0x708] sm:$0xff] %v918
        %1175 = vst [vmem:[%s174 + $0x710] sm:$0xff] %v919
        %1176 = vst [vmem:[%s174 + $0x718] sm:$0xff] %v920
        %1177 = vst [vmem:[%s174 + $0x720] sm:$0xff] %v921
        %1178 = vst [vmem:[%s174 + $0x728] sm:$0xff] %v922
        %1179 = vst [vmem:[%s174 + $0x730] sm:$0xff] %v923
        %1180 = vst [vmem:[%s174 + $0x738] sm:$0xff] %v924
        %1181 = vst [vmem:[%s174 + $0x740] sm:$0xff] %v925
        %1182 = vst [vmem:[%s174 + $0x748] sm:$0xff] %v926
        %1183 = vst [vmem:[%s174 + $0x750] sm:$0xff] %v927
        %1184 = vst [vmem:[%s174 + $0x758] sm:$0xff] %v928
        %1185 = vst [vmem:[%s174 + $0x760] sm:$0xff] %v929
        %1186 = vst [vmem:[%s174 + $0x768] sm:$0xff] %v930
        %1187 = vst [vmem:[%s174 + $0x770] sm:$0xff] %v931
        %1188 = vst [vmem:[%s174 + $0x778] sm:$0xff] %v932
        %1189 = vst [vmem:[%s174 + $0x780] sm:$0xff] %v933
        %1190 = vst [vmem:[%s174 + $0x788] sm:$0xff] %v934
        %1191 = vst [vmem:[%s174 + $0x790] sm:$0xff] %v935
        %1192 = vst [vmem:[%s174 + $0x798] sm:$0xff] %v936
        %1193 = vst [vmem:[%s174 + $0x7a0] sm:$0xff] %v937
        %1194 = vst [vmem:[%s174 + $0x7a8] sm:$0xff] %v938
        %1195 = vst [vmem:[%s174 + $0x7b0] sm:$0xff] %v939
        %1196 = vst [vmem:[%s174 + $0x7b8] sm:$0xff] %v940
        %1197 = vst [vmem:[%s174 + $0x7c0] sm:$0xff] %v941
        %1198 = vst [vmem:[%s174 + $0x7c8] sm:$0xff] %v942
        %1199 = vst [vmem:[%s174 + $0x7d0] sm:$0xff] %v943
        %1200 = vst [vmem:[%s174 + $0x7d8] sm:$0xff] %v944
        %1201 = vst [vmem:[%s174 + $0x7e0] sm:$0xff] %v945
        %1202 = vst [vmem:[%s174 + $0x7e8] sm:$0xff] %v946
        %1203 = vst [vmem:[%s174 + $0x7f0] sm:$0xff] %v947
        %1204 = vst [vmem:[%s174 + $0x7f8] sm:$0xff] %v948
        %s1205 = sand.u32 %s75, 1
        %s1206 = scalar_lea.sflag [#allocation4], %s1205
        %s1207 = sand.u32 %s75, 1
        %s1208 = smul.addr %s1207, 2048
        %s1209 = scalar_lea.vmem [#allocation7], %s1208
        // Predicated region
        $region37: #{tpu_custom_call.1} parent=27 // pred_check
          %p1210 = pneg %p85
        $region38: #{tpu_custom_call.1} parent=27 // pred_check_branch
          %1212 = sbr.rel (%p1210) target = $region40
        $region39: #{tpu_custom_call.1} parent=27 // pred_region
          %s1213 = smul.u32 64, %s20
          %s1215 = ssub.s32 32768, 32768
          %1216 = vsyncadd %s1206, %s1215
          %s1217 = smul.addr %s1213, 4
          %s1218 = smul.addr %s1217, 128
          %s1219 = scalar_lea.hbm %s2, %s1218
          %s1220 = sshll.u32 %s1209, 4
          %s1221 = int_to_ptr.vmem [resolvable:$true] %s1220
          %1226 = dma.vmem_to_hbm [thread:$0]  %s1221, 32768, %s1219, %s1206, 512, 512, 32
        $region40: #{tpu_custom_call.1} parent=27 // pred_fallthru
          _
      $region28: #{tpu_custom_call.1} parent=5 // pred_fallthru
        _
      %p1227 = scmp.le.s32.totalorder 2, %s15
      // Predicated region
      $region41: #{tpu_custom_call.1} parent=5 // pred_check
        %p1228 = pneg %p1227
      $region42: #{tpu_custom_call.1} parent=5 // pred_check_branch
        %1230 = sbr.rel (%p1228) target = $region44
      $region43: #{tpu_custom_call.1} parent=5 // pred_region
        %s1231 = ssub.s32 %s15, 2
        // Predicated region
        $region45: #{tpu_custom_call.1} parent=43 // pred_check
          %p1232 = pneg %p91
        $region46: #{tpu_custom_call.1} parent=43 // pred_check_branch
          %1234 = sbr.rel (%p1232) target = $region48
        $region47: #{tpu_custom_call.1} parent=43 // pred_region
          %s1235 = sand.u32 %s76, 1
          %s1236 = scalar_lea.sflag [#allocation4], %s1235
          %s1237 = sand.u32 %s76, 1
          %s1238 = smul.addr %s1237, 2048
          %s1239 = scalar_lea.vmem [#allocation7], %s1238
          %1240 = dma.done %s1236, 32768
        $region48: #{tpu_custom_call.1} parent=43 // pred_fallthru
          _
      $region44: #{tpu_custom_call.1} parent=5 // pred_fallthru
        _
    $region6: #{tpu_custom_call.1} parent=1 // loop_footer
      %s19 = sadd.s32 1, %s15
    $region7: #{tpu_custom_call.1} parent=1 // loop_footer_branch
      %14 = sbr.rel target = $region3
    $region8: #{tpu_custom_call.1} parent=1 // loop_exit
      _
    %1241 = vsyncpa [#allocation3], 1
    %s1242 = scalar_lea.sflag [#allocation3], 1
    %1243 = vsyncpa %s1242, 1
    %1244 = vsyncpa [#allocation4], 1
    %s1245 = scalar_lea.sflag [#allocation4], 1
    %1246 = vsyncpa %s1245, 1
    %1247 = vsyncpa [#allocation5], 1
    %s1248 = scalar_lea.sflag [#allocation5], 1
    %1249 = vsyncpa %s1248, 1

</llo_original>
